<compile_context>
chip_gen: v7x
topology: tpu7x:2x2x1
jax: 0.10.0
libtpu: 0.0.40
codegen_flags: <defaults>
</compile_context>

<pallas_src>
import jax
import jax.numpy as jnp
from jax import lax
from jax.experimental import pallas as pl
from jax.experimental.pallas import tpu as pltpu


def _biaffine_kernel(x_ref, u_ref, ub_ref, y_ref, o_ref, t_ref):
    # x_ref : (Sx_t, I)        compute dtype   (resident across the Sy axis)
    # u_ref : (I, O*K_pad)     compute dtype   (resident across the whole grid)
    # ub_ref: (1, O*K_pad)     f32             U bias row (zeros when bias_x=False)
    # y_ref : (Sy_t, K_pad)    compute dtype   (contains the bias_y ones column)
    # o_ref : (O, Sx_t, Sy_t)  out dtype
    # t_ref : (Sx_t, O*K_pad)  stage-1 scratch, carried across the Sy grid axis
    n_out = o_ref.shape[0]
    k_pad = y_ref.shape[-1]

    @pl.when(pl.program_id(2) == 0)
    def _():
        # Stage 1 hoisted out of the Sy loop: one wide matmul per (batch, Sx tile);
        # the U bias row is added here so it rides through the stage-2 MXU work.
        t = jnp.dot(x_ref[...], u_ref[...], preferred_element_type=jnp.float32)
        t_ref[...] = (t + ub_ref[...]).astype(t_ref.dtype)

    y_t = y_ref[...]
    if y_t.dtype != t_ref.dtype:          # only when an f32 stage-1 scratch is requested
        y_t = y_t.astype(t_ref.dtype)
    # contract dim 1 of both operands -> A @ B^T without an explicit transpose
    dn = (((1,), (1,)), ((), ()))
    for o in range(n_out):                # O is small and static -> unrolled
        core = lax.dot_general(
            t_ref[:, o * k_pad:(o + 1) * k_pad],   # lane-aligned slice (K_pad % 128 == 0)
            y_t, dn, preferred_element_type=jnp.float32)
        o_ref[o, :, :] = core.astype(o_ref.dtype)


def _round_up(n, m):
    return ((n + m - 1) // m) * m


def _cdiv(a, b):
    return (a + b - 1) // b


def biaffine_forward(x, y, U, bias_x=True, bias_y=True, *,
                     compute_dtype=jnp.bfloat16,
                     stage1_dtype=None,            # f32 for a tighter stage-1/2 accumulation
                     out_dtype=None,               # jnp.bfloat16 halves output HBM traffic
                     sx_tile=256, sy_tile=512,
                     channels_last=True,
                     single_buffer_const_inputs=False,
                     vmem_limit_bytes=None):
    """x: (B, Sx, in), y: (B, Sy, in), U: (in+bx, out, in+by) -> (B, Sx, Sy, out)."""
    B, Sx, I = x.shape
    _, Sy, J = y.shape
    Iu, O, Ju = U.shape
    assert Iu == I + int(bias_x) and Ju == J + int(bias_y)

    out_dtype = x.dtype if out_dtype is None else out_dtype
    stage1_dtype = compute_dtype if stage1_dtype is None else stage1_dtype

    # ---- lane-aligned contraction width (review item #1) ----
    K = J + (1 if bias_y else 0)
    K_pad = _round_up(K, 128)

    # ---- wide core tensor: per-o column groups of width K_pad (zero padded) ----
    u_wide = jnp.zeros((I, O, K_pad), compute_dtype)
    u_wide = u_wide.at[:, :, :K].set(U[:I, :, :K].astype(compute_dtype))
    u_wide = u_wide.reshape(I, O * K_pad)

    # ---- U bias row (bias_x), added once per Sx tile inside the kernel ----
    u_brow = jnp.zeros((O, K_pad), jnp.float32)
    if bias_x:
        u_brow = u_brow.at[:, :K].set(U[I, :, :K].astype(jnp.float32))
    u_brow = u_brow.reshape(1, O * K_pad)

    # ---- VMEM budget (generation aware; fallback = v7x's 64 MiB) ----
    try:
        vmem_cap = int(pltpu.get_tpu_info().vmem_capacity_bytes)
    except Exception:
        vmem_cap = 64 << 20
    budget = (vmem_cap * 3) // 4
    if vmem_limit_bytes is None:
        vmem_limit_bytes = int(budget)

    comp_bytes = jnp.dtype(compute_dtype).itemsize
    out_bytes = jnp.dtype(out_dtype).itemsize
    t_bytes = jnp.dtype(stage1_dtype).itemsize
    u_bufs = 1 if single_buffer_const_inputs else 2

    def _footprint(tsx, tsy):
        return (2 * O * tsx * tsy * out_bytes            # output (double buffered)
                + 2 * tsy * K_pad * comp_bytes           # y block
                + 2 * tsx * I * comp_bytes               # x block
                + u_bufs * I * O * K_pad * comp_bytes    # U_wide block
                + u_bufs * O * K_pad * 4                 # U bias row block
                + tsx * O * K_pad * t_bytes)             # stage-1 scratch

    # ---- tile selection ----
    sxp8 = _round_up(Sx, 8)
    syp128 = _round_up(Sy, 128)
    tsx = min(_round_up(sx_tile, 8), sxp8)
    tsy = min(_round_up(sy_tile, 128), syp128)
    # v7x has 2 TensorCores: make sure at least two parallel (B, Sx-tile) blocks exist.
    if B * _cdiv(sxp8, tsx) < 2 and sxp8 >= 16:
        tsx = _round_up(_cdiv(sxp8, 2), 8)
    # shrink tiles until the double-buffered working set fits the budget
    while _footprint(tsx, tsy) > budget:
        if tsy > 128:
            tsy = max(128, ((tsy // 2) // 128) * 128)
        elif tsx > 8:
            tsx = max(8, ((tsx // 2) // 8) * 8)
        else:
            break
    # TODO(synk): for very large I*O*K_pad (e.g. I=J~768, O~50) the resident U block /
    # t scratch should be tiled over O (extra grid axis) or stage 1 precomputed by XLA.

    Sx_pad = _round_up(Sx, tsx)
    Sy_pad = _round_up(Sy, tsy)
    grid = (B, Sx_pad // tsx, Sy_pad // tsy)

    # ---- padded / cast inputs (pad rows are zero; their outputs get sliced off) ----
    xc = x.astype(compute_dtype)
    if Sx_pad != Sx:
        xc = jnp.pad(xc, ((0, 0), (0, Sx_pad - Sx), (0, 0)))
    y_pad = jnp.zeros((B, Sy_pad, K_pad), compute_dtype)
    y_pad = y_pad.at[:, :Sy, :J].set(y.astype(compute_dtype))
    if bias_y:
        y_pad = y_pad.at[:, :Sy, J].set(1)

    # ---- optional single buffering for grid-constant blocks (VMEM headroom) ----
    if single_buffer_const_inputs:
        u_spec = pl.BlockSpec((I, O * K_pad), lambda b, i, j: (0, 0),
                              pipeline_mode=pl.Buffered(1))
        ub_spec = pl.BlockSpec((1, O * K_pad), lambda b, i, j: (0, 0),
                               pipeline_mode=pl.Buffered(1))
    else:
        u_spec = pl.BlockSpec((I, O * K_pad), lambda b, i, j: (0, 0))
        ub_spec = pl.BlockSpec((1, O * K_pad), lambda b, i, j: (0, 0))

    cost = pl.CostEstimate(
        flops=int(2 * B * Sx_pad * I * O * K_pad            # stage 1 (once per Sx tile)
                  + 2 * B * Sx_pad * Sy_pad * O * K_pad),   # stage 2
        transcendentals=0,
        bytes_accessed=int(B * Sx_pad * I * comp_bytes
                           + B * Sy_pad * K_pad * comp_bytes
                           + I * O * K_pad * comp_bytes
                           + B * O * Sx_pad * Sy_pad * out_bytes))

    out = pl.pallas_call(
        _biaffine_kernel,
        out_shape=jax.ShapeDtypeStruct((B, O, Sx_pad, Sy_pad), out_dtype),
        grid_spec=pltpu.PrefetchScalarGridSpec(
            num_scalar_prefetch=0,
            grid=grid,
            in_specs=[
                pl.BlockSpec((pl.Squeezed(), tsx, I),     lambda b, i, j: (b, i, 0)),  # x
                u_spec,                                                                 # U_wide
                ub_spec,                                                                # U bias row
                pl.BlockSpec((pl.Squeezed(), tsy, K_pad), lambda b, i, j: (b, j, 0)),  # y
            ],
            out_specs=pl.BlockSpec(
                (pl.Squeezed(), O, tsx, tsy), lambda b, i, j: (b, 0, i, j)),
            scratch_shapes=[pltpu.VMEM((tsx, O * K_pad), stage1_dtype)],
        ),
        compiler_params=pltpu.CompilerParams(
            dimension_semantics=("parallel", "parallel", "arbitrary"),
            vmem_limit_bytes=int(vmem_limit_bytes),
        ),
        cost_estimate=cost,
    )(xc, u_wide, u_brow, y_pad)

    if Sx_pad != Sx or Sy_pad != Sy:
        out = out[:, :, :Sx, :Sy]
    if channels_last:
        # PyTorch axis convention (B, Sx, Sy, O).  Skippable (channels_last=False) if
        # the consumer accepts the kernel-native, lane-dense (B, O, Sx, Sy) layout.
        out = jnp.transpose(out, (0, 2, 3, 1))
    return out


if __name__ == "__main__":
    # small, deterministic example shapes consistent with the module's forward
    batch, seq, in_size, out_size = 2, 8, 32, 4
    bias_x, bias_y = True, True

    key = jax.random.PRNGKey(0)
    kx, ky, ku = jax.random.split(key, 3)
    x = jax.random.normal(kx, (batch, seq, in_size), dtype=jnp.float32)
    y = jax.random.normal(ky, (batch, seq, in_size), dtype=jnp.float32)
    # deterministic synthetic parameter init (torch.Tensor in __init__ is uninitialized)
    U = jax.random.normal(
        ku, (in_size + int(bias_x), out_size, in_size + int(bias_y)),
        dtype=jnp.float32) * 0.1

    out = biaffine_forward(x, y, U, bias_x=bias_x, bias_y=bias_y)
    out = jax.block_until_ready(out)
    assert out.shape == (batch, seq, seq, out_size)

    # reference with matched bf16-input precision (f32 accumulation)
    xb = jnp.concatenate([x, jnp.ones_like(x[..., :1])], axis=-1).astype(jnp.bfloat16)
    yb = jnp.concatenate([y, jnp.ones_like(y[..., :1])], axis=-1).astype(jnp.bfloat16)
    ref = jnp.einsum('bxi,ioj,byj->bxyo', xb, U.astype(jnp.bfloat16), yb,
                     preferred_element_type=jnp.float32).astype(out.dtype)
    assert jnp.allclose(out, ref, atol=5e-2, rtol=5e-2)

    print("KERNEL_OK")
</pallas_src>

<mosaic_0001>
module attributes {stable_mosaic.version = 11 : i64} {
  func.func @_biaffine_kernel(%arg0: i32, %arg1: i32, %arg2: i32, %arg3: memref<1x8x32xbf16, #tpu.memory_space<vmem>>, %arg4: memref<32x512xbf16, #tpu.memory_space<vmem>>, %arg5: memref<1x512xf32, #tpu.memory_space<vmem>>, %arg6: memref<1x128x128xbf16, #tpu.memory_space<vmem>>, %arg7: memref<1x4x8x128xf32, #tpu.memory_space<vmem>>, %arg8: memref<8x512xbf16, #tpu.memory_space<vmem>>) attributes {dimension_semantics = [#tpu.dimension_semantics<parallel>, #tpu.dimension_semantics<parallel>, #tpu.dimension_semantics<arbitrary>], iteration_bounds = array<i64: 2, 1, 1>, scalar_prefetch = 0 : i64, scratch_operands = 1 : i64, tpu.core_type = #tpu.core_type<tc>, window_params = [{transform_indices = @transform_0, window_bounds = array<i64: 1, 8, 32>}, {pipeline_mode = #tpu.pipeline_mode<synchronous>, transform_indices = @transform_1, window_bounds = array<i64: 32, 512>}, {pipeline_mode = #tpu.pipeline_mode<synchronous>, transform_indices = @transform_2, window_bounds = array<i64: 1, 512>}, {transform_indices = @transform_3, window_bounds = array<i64: 1, 128, 128>}, {transform_indices = @transform_4, window_bounds = array<i64: 1, 4, 8, 128>}]} {
    %c0_i32 = arith.constant 0 : i32
    %0 = arith.cmpi eq, %arg2, %c0_i32 : i32
    %1 = arith.extui %0 : i1 to i32
    %c0_i32_0 = arith.constant 0 : i32
    %2 = arith.cmpi ne, %1, %c0_i32_0 : i32
    scf.if %2 {
      %c0_24 = arith.constant 0 : index
      %c0_25 = arith.constant 0 : index
      %c0_26 = arith.constant 0 : index
      %25 = vector.load %arg3[%c0_24, %c0_25, %c0_26] : memref<1x8x32xbf16, #tpu.memory_space<vmem>>, vector<1x8x32xbf16>
      %26 = vector.shape_cast %25 : vector<1x8x32xbf16> to vector<8x32xbf16>
      %c0_27 = arith.constant 0 : index
      %c0_28 = arith.constant 0 : index
      %27 = vector.load %arg4[%c0_27, %c0_28] : memref<32x512xbf16, #tpu.memory_space<vmem>>, vector<32x512xbf16>
      %cst_29 = arith.constant dense<0.000000e+00> : vector<8x512xf32>
      %28 = tpu.matmul %26, %27, %cst_29 {dimension_numbers = #tpu.dot_dimension_numbers<[1], [0], [0], [1], [0, 0, 1, 1], [], []>} : vector<8x32xbf16>, vector<32x512xbf16>, vector<8x512xf32> -> vector<8x512xf32>
      %c0_30 = arith.constant 0 : index
      %c0_31 = arith.constant 0 : index
      %29 = vector.load %arg5[%c0_30, %c0_31] : memref<1x512xf32, #tpu.memory_space<vmem>>, vector<1x512xf32>
      %30 = vector.broadcast %29 : vector<1x512xf32> to vector<8x512xf32>
      %31 = arith.addf %28, %30 : vector<8x512xf32>
      %32 = arith.truncf %31 : vector<8x512xf32> to vector<8x512xbf16>
      %c0_32 = arith.constant 0 : index
      %c0_33 = arith.constant 0 : index
      %33 = vector.load %arg8[%c0_32, %c0_33] : memref<8x512xbf16, #tpu.memory_space<vmem>>, vector<8x512xbf16>
      tpu.vector_store %arg8[%c0_32, %c0_33], %32 {strides = array<i32>} : memref<8x512xbf16, #tpu.memory_space<vmem>>, vector<8x512xbf16>,
    } else {
    }
    %c0 = arith.constant 0 : index
    %c0_1 = arith.constant 0 : index
    %c0_2 = arith.constant 0 : index
    %3 = vector.load %arg6[%c0, %c0_1, %c0_2] : memref<1x128x128xbf16, #tpu.memory_space<vmem>>, vector<1x128x128xbf16>
    %4 = vector.shape_cast %3 : vector<1x128x128xbf16> to vector<128x128xbf16>
    %c0_3 = arith.constant 0 : index
    %c0_4 = arith.constant 0 : index
    %5 = vector.load %arg8[%c0_3, %c0_4] : memref<8x512xbf16, #tpu.memory_space<vmem>>, vector<8x128xbf16>
    %cst = arith.constant dense<0.000000e+00> : vector<8x128xf32>
    %6 = tpu.matmul %5, %4, %cst {dimension_numbers = #tpu.dot_dimension_numbers<[1], [1], [0], [0], [0, 0, 1, 0], [], []>} : vector<8x128xbf16>, vector<128x128xbf16>, vector<8x128xf32> -> vector<8x128xf32>
    %c0_5 = arith.constant 0 : index
    %c0_6 = arith.constant 0 : index
    %c0_7 = arith.constant 0 : index
    %c0_8 = arith.constant 0 : index
    %7 = vector.load %arg7[%c0_5, %c0_6, %c0_7, %c0_8] : memref<1x4x8x128xf32, #tpu.memory_space<vmem>>, vector<1x1x8x128xf32>
    %8 = vector.shape_cast %7 : vector<1x1x8x128xf32> to vector<8x128xf32>
    %9 = vector.shape_cast %6 : vector<8x128xf32> to vector<1x1x8x128xf32>
    tpu.vector_store %arg7[%c0_5, %c0_6, %c0_7, %c0_8], %9 {strides = array<i32>} : memref<1x4x8x128xf32, #tpu.memory_space<vmem>>, vector<1x1x8x128xf32>,
    %c0_9 = arith.constant 0 : index
    %c128 = arith.constant 128 : index
    %10 = vector.load %arg8[%c0_9, %c128] : memref<8x512xbf16, #tpu.memory_space<vmem>>, vector<8x128xbf16>
    %cst_10 = arith.constant dense<0.000000e+00> : vector<8x128xf32>
    %11 = tpu.matmul %10, %4, %cst_10 {dimension_numbers = #tpu.dot_dimension_numbers<[1], [1], [0], [0], [0, 0, 1, 0], [], []>} : vector<8x128xbf16>, vector<128x128xbf16>, vector<8x128xf32> -> vector<8x128xf32>
    %c0_11 = arith.constant 0 : index
    %c1 = arith.constant 1 : index
    %c0_12 = arith.constant 0 : index
    %c0_13 = arith.constant 0 : index
    %12 = vector.load %arg7[%c0_11, %c1, %c0_12, %c0_13] : memref<1x4x8x128xf32, #tpu.memory_space<vmem>>, vector<1x1x8x128xf32>
    %13 = vector.shape_cast %12 : vector<1x1x8x128xf32> to vector<8x128xf32>
    %14 = vector.shape_cast %11 : vector<8x128xf32> to vector<1x1x8x128xf32>
    tpu.vector_store %arg7[%c0_11, %c1, %c0_12, %c0_13], %14 {strides = array<i32>} : memref<1x4x8x128xf32, #tpu.memory_space<vmem>>, vector<1x1x8x128xf32>,
    %c0_14 = arith.constant 0 : index
    %c256 = arith.constant 256 : index
    %15 = vector.load %arg8[%c0_14, %c256] : memref<8x512xbf16, #tpu.memory_space<vmem>>, vector<8x128xbf16>
    %cst_15 = arith.constant dense<0.000000e+00> : vector<8x128xf32>
    %16 = tpu.matmul %15, %4, %cst_15 {dimension_numbers = #tpu.dot_dimension_numbers<[1], [1], [0], [0], [0, 0, 1, 0], [], []>} : vector<8x128xbf16>, vector<128x128xbf16>, vector<8x128xf32> -> vector<8x128xf32>
    %c0_16 = arith.constant 0 : index
    %c2 = arith.constant 2 : index
    %c0_17 = arith.constant 0 : index
    %c0_18 = arith.constant 0 : index
    %17 = vector.load %arg7[%c0_16, %c2, %c0_17, %c0_18] : memref<1x4x8x128xf32, #tpu.memory_space<vmem>>, vector<1x1x8x128xf32>
    %18 = vector.shape_cast %17 : vector<1x1x8x128xf32> to vector<8x128xf32>
    %19 = vector.shape_cast %16 : vector<8x128xf32> to vector<1x1x8x128xf32>
    tpu.vector_store %arg7[%c0_16, %c2, %c0_17, %c0_18], %19 {strides = array<i32>} : memref<1x4x8x128xf32, #tpu.memory_space<vmem>>, vector<1x1x8x128xf32>,
    %c0_19 = arith.constant 0 : index
    %c384 = arith.constant 384 : index
    %20 = vector.load %arg8[%c0_19, %c384] : memref<8x512xbf16, #tpu.memory_space<vmem>>, vector<8x128xbf16>
    %cst_20 = arith.constant dense<0.000000e+00> : vector<8x128xf32>
    %21 = tpu.matmul %20, %4, %cst_20 {dimension_numbers = #tpu.dot_dimension_numbers<[1], [1], [0], [0], [0, 0, 1, 0], [], []>} : vector<8x128xbf16>, vector<128x128xbf16>, vector<8x128xf32> -> vector<8x128xf32>
    %c0_21 = arith.constant 0 : index
    %c3 = arith.constant 3 : index
    %c0_22 = arith.constant 0 : index
    %c0_23 = arith.constant 0 : index
    %22 = vector.load %arg7[%c0_21, %c3, %c0_22, %c0_23] : memref<1x4x8x128xf32, #tpu.memory_space<vmem>>, vector<1x1x8x128xf32>
    %23 = vector.shape_cast %22 : vector<1x1x8x128xf32> to vector<8x128xf32>
    %24 = vector.shape_cast %21 : vector<8x128xf32> to vector<1x1x8x128xf32>
    tpu.vector_store %arg7[%c0_21, %c3, %c0_22, %c0_23], %24 {strides = array<i32>} : memref<1x4x8x128xf32, #tpu.memory_space<vmem>>, vector<1x1x8x128xf32>,
    return
  }
  func.func @transform_0(%arg0: i32, %arg1: i32, %arg2: i32) -> (i32, i32, i32) {
    %c0_i32 = arith.constant 0 : i32
    %c0_i32_0 = arith.constant 0 : i32
    return %arg0, %arg1, %c0_i32 : i32, i32, i32
  }
  func.func @transform_1(%arg0: i32, %arg1: i32, %arg2: i32) -> (i32, i32) {
    %c0_i32 = arith.constant 0 : i32
    %c0_i32_0 = arith.constant 0 : i32
    %c0_i32_1 = arith.constant 0 : i32
    return %c0_i32, %c0_i32_0 : i32, i32
  }
  func.func @transform_2(%arg0: i32, %arg1: i32, %arg2: i32) -> (i32, i32) {
    %c0_i32 = arith.constant 0 : i32
    %c0_i32_0 = arith.constant 0 : i32
    %c0_i32_1 = arith.constant 0 : i32
    return %c0_i32, %c0_i32_0 : i32, i32
  }
  func.func @transform_3(%arg0: i32, %arg1: i32, %arg2: i32) -> (i32, i32, i32) {
    %c0_i32 = arith.constant 0 : i32
    %c0_i32_0 = arith.constant 0 : i32
    return %arg0, %arg2, %c0_i32 : i32, i32, i32
  }
  func.func @transform_4(%arg0: i32, %arg1: i32, %arg2: i32) -> (i32, i32, i32, i32) {
    %c0_i32 = arith.constant 0 : i32
    %c0_i32_0 = arith.constant 0 : i32
    return %arg0, %c0_i32, %arg1, %arg2 : i32, i32, i32, i32
  }
}

</mosaic_0001>

<llo_original>
// kernel: tpu_custom_call.1
$region0: #{tpu_custom_call.1}
  #allocation0 [shape = 'u32[]', space=smem, size = 0x4, offset = 0x4, fixed_abs, tag = 'smem constant byte address 0x4 - core index']
  #allocation1 [shape = 'u32[144,128]{1,0:T(1,128)}', space=vmem, size = 0x12000, scoped, tag = 'internal scratch']
  #allocation2 [shape = 'bf16[8,512]{1,0:T(8,128)(2,1)}', space=vmem, size = 0x2000, scoped, tag = 'scratch operand']
  %s0 = inlined_call_operand.hbm [shape: bf16[2,8,32], index: 0, kind: input, shape index: {}]
  %s1 = inlined_call_operand.hbm [shape: bf16[32,512], index: 1, kind: input, shape index: {}]
  %s2 = inlined_call_operand.vmem [shape: f32[1,512], index: 2, kind: input, shape index: {}]
  %s3 = inlined_call_operand.hbm [shape: bf16[2,128,128], index: 3, kind: input, shape index: {}]
  %s4 = inlined_call_operand.hbm [shape: f32[2,4,8,128], index: 4, kind: output, shape index: {}]
  %s5 = sld [smem:[#allocation0]]
  $region65: #{tpu_custom_call.1} parent=0
    _
  %s7 = ssub.s32 1, %s5
  %s8 = scalar_select 0, %s7, %s5
  $region1: #{tpu_custom_call.1} parent=0
    #allocation3 [shape = 'u8[4096]{0}', space=vmem, size = 0x1000, scoped, tag = 'input window, operand 0']
    #allocation4 [shape = 's32[2]{0}', space=sflag, size = 0x8, scoped, tag = 'scoped memory for tpu_custom_call.1']
    #allocation5 [shape = 's32[2]{0}', space=sflag, size = 0x8, scoped, tag = 'scoped memory for tpu_custom_call.1']
    #allocation6 [shape = 'u8[32768]{0}', space=vmem, size = 0x8000, scoped, tag = 'input window, operand 1, single buffered']
    #allocation7 [shape = 's32[1]{0}', space=sflag, size = 0x4, scoped, tag = 'scoped memory for tpu_custom_call.1']
    #allocation8 [shape = 'u8[65536]{0}', space=vmem, size = 0x10000, scoped, tag = 'input window, operand 3']
    #allocation9 [shape = 'u8[32768]{0}', space=vmem, size = 0x8000, scoped, tag = 'output window, operand 0']
    %9 = vsyncpa [#allocation4], 0
    %s10 = scalar_lea.sflag [#allocation4], 1
    %11 = vsyncpa %s10, 0
    %12 = vsyncpa [#allocation7], 0
    %13 = vsyncpa [#allocation5], 0
    %s14 = scalar_lea.sflag [#allocation5], 1
    %15 = vsyncpa %s14, 0
    loop: start=0, step=1, limit=4
    $region2: #{tpu_custom_call.1} parent=1 // loop_pre_header
      _
    $region3: #{tpu_custom_call.1} parent=1 // loop_header
      %s17 = sphi 0, %s21
      %p18 = scmp.ge.s32.totalorder %s17, 4
      %s24 = sphi 0, %s43
      %s25 = sphi 0, %s39
      %s26 = sphi 0, %s35
      %s27 = sphi 0, %s24
      %s28 = sphi 0, %s25
      %s29 = sphi 0, %s26
      %s30 = sphi 0, %s27
      %s31 = sphi 0, %s28
      %s32 = sphi 0, %s29
      %s48 = sphi 0, %s50
      %s51 = sphi 0, %s48
      %s52 = sphi 0, %s51
      %s68 = sphi 0, %s52
      %s72 = sphi 0, %s72
      %s74 = sphi 0, %s72
      %s75 = sphi 0, %s74
      %s89 = sphi 0, %s75
      %s93 = sphi 0, %s93
      %s95 = sphi 0, %s93
      %s96 = sphi 0, %s95
      %s110 = sphi 0, %s96
      %s118 = sphi 0, %s120
      %s121 = sphi 0, %s118
      %s122 = sphi 0, %s121
      %s138 = sphi 0, %s122
      %s148 = sphi 0, %s150
      %s151 = sphi 0, %s148
      %s152 = sphi 0, %s151
      %s168 = sphi 0, %s152
    $region4: #{tpu_custom_call.1} parent=1 // loop_header_branch
      %20 = sbr.rel (%p18) target = $region8
    $region5: #{tpu_custom_call.1} parent=1 // loop_body
      %s22 = ssub.s32 %s17, 1
      %s23 = ssub.s32 %s17, 2
      %s33 = sadd.s32 1, %s26
      %p34 = scmp.ge.s32.totalorder %s33, 1
      %s35 = scalar_select %p34, 0, %s33
      %s36 = sadd.s32 1, %s25
      %s37 = scalar_select %p34, %s36, %s25
      %p38 = scmp.ge.s32.totalorder %s37, 1
      %s39 = scalar_select %p38, 0, %s37
      %s40 = sadd.s32 1, %s24
      %s41 = scalar_select %p38, %s40, %s24
      %p42 = scmp.ge.s32.totalorder %s41, 2
      %s43 = scalar_select %p42, 0, %s41
      %s44 = ssub.s32 %s24, %s43
      %s45 = ssub.s32 %s25, %s39
      %s46 = sor.u32 %s44, %s45
      %p47 = scmp.eq.s32.totalorder %s46, 0
      %s49 = sadd.s32 %s48, 1
      %s50 = scalar_select %p47, %s48, %s49
      %p53 = pneg %p47
      %p54 = scmp.eq.s32.totalorder %s17, 1
      %p55 = por %p53, %p54
      %p56 = scmp.ne.s32.totalorder %s48, %s51
      %p57 = scmp.eq.s32.totalorder %s17, 0
      %p58 = por %p56, %p57
      %p59 = scmp.ne.s32.totalorder %s48, %s51
      %p60 = scmp.eq.s32.totalorder %s22, 1
      %p61 = por %p59, %p60
      %p62 = scmp.ne.s32.totalorder %s51, %s52
      %p63 = scmp.eq.s32.totalorder %s22, 0
      %p64 = por %p62, %p63
      %p65 = scmp.ne.s32.totalorder %s51, %s52
      %p66 = scmp.eq.s32.totalorder %s23, 1
      %p67 = por %p65, %p66
      %p69 = scmp.ne.s32.totalorder %s52, %s68
      %p70 = scmp.eq.s32.totalorder %s23, 0
      %p71 = por %p69, %p70
      %s73 = sadd.s32 %s72, 1
      %p76 = scmp.eq.s32.totalorder %s17, 1
      %p77 = scmp.ne.s32.totalorder %s72, %s74
      %p78 = scmp.eq.s32.totalorder %s17, 0
      %p79 = por %p77, %p78
      %p80 = scmp.ne.s32.totalorder %s72, %s74
      %p81 = scmp.eq.s32.totalorder %s22, 1
      %p82 = por %p80, %p81
      %p83 = scmp.ne.s32.totalorder %s74, %s75
      %p84 = scmp.eq.s32.totalorder %s22, 0
      %p85 = por %p83, %p84
      %p86 = scmp.ne.s32.totalorder %s74, %s75
      %p87 = scmp.eq.s32.totalorder %s23, 1
      %p88 = por %p86, %p87
      %p90 = scmp.ne.s32.totalorder %s75, %s89
      %p91 = scmp.eq.s32.totalorder %s23, 0
      %p92 = por %p90, %p91
      %s94 = sadd.s32 %s93, 1
      %p97 = scmp.eq.s32.totalorder %s17, 1
      %p98 = scmp.ne.s32.totalorder %s93, %s95
      %p99 = scmp.eq.s32.totalorder %s17, 0
      %p100 = por %p98, %p99
      %p101 = scmp.ne.s32.totalorder %s93, %s95
      %p102 = scmp.eq.s32.totalorder %s22, 1
      %p103 = por %p101, %p102
      %p104 = scmp.ne.s32.totalorder %s95, %s96
      %p105 = scmp.eq.s32.totalorder %s22, 0
      %p106 = por %p104, %p105
      %p107 = scmp.ne.s32.totalorder %s95, %s96
      %p108 = scmp.eq.s32.totalorder %s23, 1
      %p109 = por %p107, %p108
      %p111 = scmp.ne.s32.totalorder %s96, %s110
      %p112 = scmp.eq.s32.totalorder %s23, 0
      %p113 = por %p111, %p112
      %s114 = ssub.s32 %s24, %s43
      %s115 = ssub.s32 %s26, %s35
      %s116 = sor.u32 %s114, %s115
      %p117 = scmp.eq.s32.totalorder %s116, 0
      %s119 = sadd.s32 %s118, 1
      %s120 = scalar_select %p117, %s118, %s119
      %p123 = pneg %p117
      %p124 = scmp.eq.s32.totalorder %s17, 1
      %p125 = por %p123, %p124
      %p126 = scmp.ne.s32.totalorder %s118, %s121
      %p127 = scmp.eq.s32.totalorder %s17, 0
      %p128 = por %p126, %p127
      %p129 = scmp.ne.s32.totalorder %s118, %s121
      %p130 = scmp.eq.s32.totalorder %s22, 1
      %p131 = por %p129, %p130
      %p132 = scmp.ne.s32.totalorder %s121, %s122
      %p133 = scmp.eq.s32.totalorder %s22, 0
      %p134 = por %p132, %p133
      %p135 = scmp.ne.s32.totalorder %s121, %s122
      %p136 = scmp.eq.s32.totalorder %s23, 1
      %p137 = por %p135, %p136
      %p139 = scmp.ne.s32.totalorder %s122, %s138
      %p140 = scmp.eq.s32.totalorder %s23, 0
      %p141 = por %p139, %p140
      %s142 = ssub.s32 %s24, %s43
      %s143 = ssub.s32 %s25, %s39
      %s144 = sor.u32 %s142, %s143
      %s145 = ssub.s32 %s26, %s35
      %s146 = sor.u32 %s144, %s145
      %p147 = scmp.eq.s32.totalorder %s146, 0
      %s149 = sadd.s32 %s148, 1
      %s150 = scalar_select %p147, %s148, %s149
      %p153 = pneg %p147
      %p154 = scmp.eq.s32.totalorder %s17, 1
      %p155 = por %p153, %p154
      %p156 = scmp.ne.s32.totalorder %s148, %s151
      %p157 = scmp.eq.s32.totalorder %s17, 0
      %p158 = por %p156, %p157
      %p159 = scmp.ne.s32.totalorder %s148, %s151
      %p160 = scmp.eq.s32.totalorder %s22, 1
      %p161 = por %p159, %p160
      %p162 = scmp.ne.s32.totalorder %s151, %s152
      %p163 = scmp.eq.s32.totalorder %s22, 0
      %p164 = por %p162, %p163
      %p165 = scmp.ne.s32.totalorder %s151, %s152
      %p166 = scmp.eq.s32.totalorder %s23, 1
      %p167 = por %p165, %p166
      %p169 = scmp.ne.s32.totalorder %s152, %s168
      %p170 = scmp.eq.s32.totalorder %s23, 0
      %p171 = por %p169, %p170
      %p172 = scmp.le.s32.totalorder 1, %s17
      %p173 = scmp.lt.s32.totalorder %s17, 3
      %p174 = pnand %p172, %p173
      %p175 = pneg %p174
      // Predicated region
      $region9: #{tpu_custom_call.1} parent=5 // pred_check
        _
      $region10: #{tpu_custom_call.1} parent=5 // pred_check_branch
        %177 = sbr.rel (%p174) target = $region12
      $region11: #{tpu_custom_call.1} parent=5 // pred_region
        %s178 = ssub.s32 %s17, 1
        // Predicated region
        $region13: #{tpu_custom_call.1} parent=11 // pred_check
          %p179 = pneg %p85
        $region14: #{tpu_custom_call.1} parent=11 // pred_check_branch
          %181 = sbr.rel (%p179) target = $region16
        $region15: #{tpu_custom_call.1} parent=11 // pred_region
          %s183 = ssub.s32 1024, 1024
          %184 = vsyncadd [#allocation7], %s183
          %s185 = sshll.u32 [#allocation6], 4
          %s186 = int_to_ptr.vmem [resolvable:$true] %s185
          %191 = dma.hbm_to_vmem [thread:$0]  %s1, 1024, %s186, [#allocation7], 256, 256, 16
        $region16: #{tpu_custom_call.1} parent=11 // pred_fallthru
          _
        // Predicated region
        $region17: #{tpu_custom_call.1} parent=11 // pred_check
          %p192 = pneg %p106
        $region18: #{tpu_custom_call.1} parent=11 // pred_check_branch
          %194 = sbr.rel (%p192) target = $region20
        $region19: #{tpu_custom_call.1} parent=11 // pred_region
          _
        $region20: #{tpu_custom_call.1} parent=11 // pred_fallthru
          _
      $region12: #{tpu_custom_call.1} parent=5 // pred_fallthru
        _
      %p195 = scmp.lt.s32.totalorder %s17, 2
      // Predicated region
      $region21: #{tpu_custom_call.1} parent=5 // pred_check
        %p196 = pneg %p195
      $region22: #{tpu_custom_call.1} parent=5 // pred_check_branch
        %198 = sbr.rel (%p196) target = $region24
      $region23: #{tpu_custom_call.1} parent=5 // pred_region
        // Predicated region
        $region25: #{tpu_custom_call.1} parent=23 // pred_check
          %p199 = pneg %p58
        $region26: #{tpu_custom_call.1} parent=23 // pred_check_branch
          %201 = sbr.rel (%p199) target = $region28
        $region27: #{tpu_custom_call.1} parent=23 // pred_region
          %s202 = sand.u32 %s17, 1
          %s203 = scalar_lea.sflag [#allocation4], %s202
          %s204 = sand.u32 %s48, 1
          %s205 = smul.addr %s204, 4
          %s206 = scalar_lea.vmem [#allocation3], %s205
          %s208 = ssub.s32 64, 64
          %209 = vsyncadd %s203, %s208
          %s210 = sadd.s32 %s25, %s24
          %s211 = smul.addr %s210, 64
          %s212 = scalar_lea.hbm %s0, %s211
          %s214 = sshll.u32 %s206, 4
          %s215 = int_to_ptr.vmem [resolvable:$true] %s214
          %217 = dma.hbm_to_vmem [thread:$0]  %s212, 64, %s215, %s203
        $region28: #{tpu_custom_call.1} parent=23 // pred_fallthru
          _
        // Predicated region
        $region29: #{tpu_custom_call.1} parent=23 // pred_check
          %p218 = pneg %p128
        $region30: #{tpu_custom_call.1} parent=23 // pred_check_branch
          %220 = sbr.rel (%p218) target = $region32
        $region31: #{tpu_custom_call.1} parent=23 // pred_region
          %s221 = sand.u32 %s17, 1
          %s222 = scalar_lea.sflag [#allocation4], %s221
          %s223 = sand.u32 %s118, 1
          %s224 = smul.addr %s223, 64
          %s225 = scalar_lea.vmem [#allocation8], %s224
          %s226 = smul.u32 16, %s26
          %s228 = ssub.s32 1024, 1024
          %229 = vsyncadd %s222, %s228
          %s230 = smul.addr %s24, 16
          %s231 = sadd.s32 %s226, %s230
          %s232 = smul.addr %s231, 64
          %s233 = scalar_lea.hbm %s3, %s232
          %s234 = sshll.u32 %s225, 4
          %s235 = int_to_ptr.vmem [resolvable:$true] %s234
          %240 = dma.hbm_to_vmem [thread:$0]  %s233, 1024, %s235, %s222, 64, 64, 4
        $region32: #{tpu_custom_call.1} parent=23 // pred_fallthru
          _
      $region24: #{tpu_custom_call.1} parent=5 // pred_fallthru
        _
      %p241 = scmp.le.s32.totalorder 1, %s17
      %p242 = scmp.lt.s32.totalorder %s17, 3
      %p243 = pnand %p241, %p242
      %p244 = pneg %p243
      // Predicated region
      $region33: #{tpu_custom_call.1} parent=5 // pred_check
        _
      $region34: #{tpu_custom_call.1} parent=5 // pred_check_branch
        %246 = sbr.rel (%p243) target = $region36
      $region35: #{tpu_custom_call.1} parent=5 // pred_region
        %s247 = ssub.s32 %s17, 1
        %s248 = sand.u32 %s22, 1
        %s249 = scalar_lea.sflag [#allocation4], %s248
        %s250 = sand.u32 %s51, 1
        %s251 = smul.addr %s250, 4
        %s252 = scalar_lea.vmem [#allocation3], %s251
        // Predicated region
        $region37: #{tpu_custom_call.1} parent=35 // pred_check
          %p253 = pneg %p64
        $region38: #{tpu_custom_call.1} parent=35 // pred_check_branch
          %255 = sbr.rel (%p253) target = $region40
        $region39: #{tpu_custom_call.1} parent=35 // pred_region
          %256 = dma.done %s249, 64
        $region40: #{tpu_custom_call.1} parent=35 // pred_fallthru
          _
        // Predicated region
        $region41: #{tpu_custom_call.1} parent=35 // pred_check
          %p257 = pneg %p85
        $region42: #{tpu_custom_call.1} parent=35 // pred_check_branch
          %259 = sbr.rel (%p257) target = $region44
        $region43: #{tpu_custom_call.1} parent=35 // pred_region
          %260 = dma.done [#allocation7], 1024
        $region44: #{tpu_custom_call.1} parent=35 // pred_fallthru
          _
        %s261 = sand.u32 %s22, 1
        %s262 = scalar_lea.sflag [#allocation4], %s261
        %s263 = sand.u32 %s121, 1
        %s264 = smul.addr %s263, 64
        %s265 = scalar_lea.vmem [#allocation8], %s264
        // Predicated region
        $region45: #{tpu_custom_call.1} parent=35 // pred_check
          %p266 = pneg %p134
        $region46: #{tpu_custom_call.1} parent=35 // pred_check_branch
          %268 = sbr.rel (%p266) target = $region48
        $region47: #{tpu_custom_call.1} parent=35 // pred_region
          %269 = dma.done %s262, 1024
        $region48: #{tpu_custom_call.1} parent=35 // pred_fallthru
          _
        %s270 = sand.u32 %s22, 1
        %s271 = scalar_lea.sflag [#allocation4], %s270
        %s272 = sand.u32 %s51, 1
        %s273 = smul.addr %s272, 4
        %s274 = scalar_lea.vmem [#allocation3], %s273
        %p275 = pneg %p64
        %p276 = pneg %p61
        %p277 = pneg %p85
        %p278 = pneg %p82
        %p279 = pneg %p106
        %p280 = pneg %p103
        %s281 = sand.u32 %s22, 1
        %s282 = scalar_lea.sflag [#allocation4], %s281
        %s283 = sand.u32 %s121, 1
        %s284 = smul.addr %s283, 64
        %s285 = scalar_lea.vmem [#allocation8], %s284
        %p286 = pneg %p134
        %p287 = pneg %p131
        %p288 = pneg %p164
        %p289 = pneg %p161
        %s290 = sand.u32 %s151, 1
        %s291 = scalar_lea.sflag [#allocation5], %s290
        %s292 = sand.u32 %s151, 1
        %s293 = smul.addr %s292, 32
        %s294 = scalar_lea.vmem [#allocation9], %s293
        %s295 = smul.u32 16, %s29
        %p297 = scmp.eq.s32.totalorder %s29, 0
        // Predicated region
        $region49: #{tpu_custom_call.1} parent=35 // pred_check
          %p298 = pneg %p297
        $region50: #{tpu_custom_call.1} parent=35 // pred_check_branch
          %300 = sbr.rel (%p298) target = $region52
        $region51: #{tpu_custom_call.1} parent=35 // pred_region
          %v301 = vld [vmem:[%s252] sm:$0xf]
          %v302 = vld [vmem:[#allocation6] sm:$0xff]
          %v303 = vld [vmem:[#allocation6 + $0x8] sm:$0xff]
          %v304 = vld [vmem:[#allocation6 + $0x10] sm:$0xff]
          %v305 = vld [vmem:[#allocation6 + $0x18] sm:$0xff]
          %v306 = vld [vmem:[#allocation6 + $0x20] sm:$0xff]
          %v307 = vld [vmem:[#allocation6 + $0x28] sm:$0xff]
          %v308 = vld [vmem:[#allocation6 + $0x30] sm:$0xff]
          %v309 = vld [vmem:[#allocation6 + $0x38] sm:$0xff]
          %v310 = vld [vmem:[%s2] sm:$0xf]
          %v312 = vlaneseq
          %v313 = vshrl.u32 %v312, 7
          %v314 = vsub.s32 0, %v313
          %v315 = vrot.slane %v310, %v314
          %v316 = vlaneseq
          %v317 = vshrl.u32 %v316, 7
          %v318 = vsub.s32 1, %v317
          %v319 = vrot.slane %v310, %v318
          %v320 = vlaneseq
          %v321 = vshrl.u32 %v320, 7
          %v322 = vsub.s32 2, %v321
          %v323 = vrot.slane %v310, %v322
          %v324 = vlaneseq
          %v325 = vshrl.u32 %v324, 7
          %v326 = vsub.s32 3, %v325
          %v327 = vrot.slane %v310, %v326
          %v340 = vunpack.c.l.b16 %v302
          %v341 = vunpack.c.h.b16 %v302
          %v342 = vunpack.c.l.b16 %v303
          %v343 = vunpack.c.h.b16 %v303
          %v344 = vunpack.c.l.b16 %v304
          %v345 = vunpack.c.h.b16 %v304
          %v346 = vunpack.c.l.b16 %v305
          %v347 = vunpack.c.h.b16 %v305
          %v348 = vunpack.c.l.b16 %v306
          %v349 = vunpack.c.h.b16 %v306
          %v350 = vunpack.c.l.b16 %v307
          %v351 = vunpack.c.h.b16 %v307
          %v352 = vunpack.c.l.b16 %v308
          %v353 = vunpack.c.h.b16 %v308
          %v354 = vunpack.c.l.b16 %v309
          %v355 = vunpack.c.h.b16 %v309
          %v356 = vpack.c.b16 %v344, %v340
          %v357 = vpack.c.b16 %v345, %v341
          %v358 = vpack.c.b16 %v346, %v342
          %v359 = vpack.c.b16 %v347, %v343
          %v360 = vpack.c.b16 %v352, %v348
          %v361 = vpack.c.b16 %v353, %v349
          %v362 = vpack.c.b16 %v354, %v350
          %v363 = vpack.c.b16 %v355, %v351
          %vm372 = vcmask 261120
          %v374 = vsel %vm372, %v301, 0
          %376 = vmatprep.subr.bf16.mxu0 %v357
          %377 = vmatpush1.bf16.msra.mxu0 %v356
          %378 = vmatprep.subr.bf16.mxu0 %v361
          %379 = vmatpush1.bf16.msra.mxu0 %v360
          %380 = vmatprep.subr.bf16.mxu0 0
          %381 = vmatpush1.bf16.msra.mxu0 0
          %382 = vmatprep.subr.bf16.mxu0 0
          %383 = vmatpush1.bf16.msra.mxu0 0
          %384 = vmatprep.subr.bf16.mxu0 0
          %385 = vmatpush1.bf16.msra.mxu0 0
          %386 = vmatprep.subr.bf16.mxu0 0
          %387 = vmatpush1.bf16.msra.mxu0 0
          %388 = vmatprep.subr.bf16.mxu0 0
          %389 = vmatpush1.bf16.msra.mxu0 0
          %390 = vmatprep.subr.bf16.mxu0 0
          %391 = vmatpush1.bf16.msra.mxu0 0
          %392 = vmatprep.subr.bf16.mxu0 0
          %393 = vmatpush1.bf16.msra.mxu0 0
          %394 = vmatprep.subr.bf16.mxu0 0
          %395 = vmatpush1.bf16.msra.mxu0 0
          %396 = vmatprep.subr.bf16.mxu0 0
          %397 = vmatpush1.bf16.msra.mxu0 0
          %398 = vmatprep.subr.bf16.mxu0 0
          %399 = vmatpush1.bf16.msra.mxu0 0
          %400 = vmatprep.subr.bf16.mxu0 0
          %401 = vmatpush1.bf16.msra.mxu0 0
          %402 = vmatprep.subr.bf16.mxu0 0
          %403 = vmatpush1.bf16.msra.mxu0 0
          %404 = vmatprep.subr.bf16.mxu0 0
          %405 = vmatpush1.bf16.msra.mxu0 0
          %406 = vmatprep.subr.bf16.mxu0 0
          %407 = vmatpush1.bf16.msra.mxu0 0
          %408 = vmatprep.mubr.bf16.mxu0 0
          %409 = vmatmul.mubr.bf16.gmra.mrb[0].mxu0 %v374
          %v410 = vpop.f32.mrb[0].mxu0
          %v411 = vadd.f32 %v315, %v410
          %v412 = vpop.f32.mrb[0].mxu0
          %v413 = vadd.f32 %v319, %v412
          %v414 = vpop.f32.mrb[0].mxu0
          %v415 = vpop.f32.mrb[0].mxu0
          %416 = vdwg.mxu0
          %417 = vmatprep.subr.bf16.mxu0 %v359
          %418 = vmatpush1.bf16.msra.mxu0 %v358
          %419 = vmatprep.subr.bf16.mxu0 %v363
          %420 = vmatpush1.bf16.msra.mxu0 %v362
          %421 = vmatprep.subr.bf16.mxu0 0
          %422 = vmatpush1.bf16.msra.mxu0 0
          %423 = vmatprep.subr.bf16.mxu0 0
          %424 = vmatpush1.bf16.msra.mxu0 0
          %425 = vmatprep.subr.bf16.mxu0 0
          %426 = vmatpush1.bf16.msra.mxu0 0
          %427 = vmatprep.subr.bf16.mxu0 0
          %428 = vmatpush1.bf16.msra.mxu0 0
          %429 = vmatprep.subr.bf16.mxu0 0
          %430 = vmatpush1.bf16.msra.mxu0 0
          %431 = vmatprep.subr.bf16.mxu0 0
          %432 = vmatpush1.bf16.msra.mxu0 0
          %433 = vmatprep.subr.bf16.mxu0 0
          %434 = vmatpush1.bf16.msra.mxu0 0
          %435 = vmatprep.subr.bf16.mxu0 0
          %436 = vmatpush1.bf16.msra.mxu0 0
          %437 = vmatprep.subr.bf16.mxu0 0
          %438 = vmatpush1.bf16.msra.mxu0 0
          %439 = vmatprep.subr.bf16.mxu0 0
          %440 = vmatpush1.bf16.msra.mxu0 0
          %441 = vmatprep.subr.bf16.mxu0 0
          %442 = vmatpush1.bf16.msra.mxu0 0
          %443 = vmatprep.subr.bf16.mxu0 0
          %444 = vmatpush1.bf16.msra.mxu0 0
          %445 = vmatprep.subr.bf16.mxu0 0
          %446 = vmatpush1.bf16.msra.mxu0 0
          %447 = vmatprep.subr.bf16.mxu0 0
          %448 = vmatpush1.bf16.msra.mxu0 0
          %449 = vmatprep.mubr.bf16.mxu0 0
          %450 = vmatmul.mubr.bf16.gmra.mrb[0].mxu0 %v374
          %v451 = vpop.f32.mrb[0].mxu0
          %v452 = vadd.f32 %v323, %v451
          %v453 = vpop.f32.mrb[0].mxu0
          %v454 = vadd.f32 %v327, %v453
          %v455 = vpop.f32.mrb[0].mxu0
          %v456 = vpop.f32.mrb[0].mxu0
          %457 = vdwg.mxu0
          %v458 = vpack.c.bf16 %v411, %v411
          %v459 = vpack.c.bf16 %v413, %v413
          %v460 = vpack.c.bf16 %v452, %v452
          %v461 = vpack.c.bf16 %v454, %v454
          %v466 = vunpack.c.l.b16 %v458
          %v467 = vunpack.c.l.b16 %v459
          %v468 = vunpack.c.l.b16 %v460
          %v469 = vunpack.c.l.b16 %v461
          %v470 = vpack.c.b16 %v467, %v466
          %v471 = vpack.c.b16 %v469, %v468
          %474 = vst [vmem:[#allocation2] sm:$0xff] %v470
          %475 = vst [vmem:[#allocation2 + $0x8] sm:$0xff] %v471
        $region52: #{tpu_custom_call.1} parent=35 // pred_fallthru
          _
        %v476 = vld [vmem:[%s265] sm:$0xf]
        %v477 = vld [vmem:[%s265 + $0x4] sm:$0xf]
        %v478 = vld [vmem:[%s265 + $0x8] sm:$0xf]
        %v479 = vld [vmem:[%s265 + $0xc] sm:$0xf]
        %v480 = vld [vmem:[%s265 + $0x10] sm:$0xf]
        %v481 = vld [vmem:[%s265 + $0x14] sm:$0xf]
        %v482 = vld [vmem:[%s265 + $0x18] sm:$0xf]
        %v483 = vld [vmem:[%s265 + $0x1c] sm:$0xf]
        %v484 = vld [vmem:[%s265 + $0x20] sm:$0xf]
        %v485 = vld [vmem:[%s265 + $0x24] sm:$0xf]
        %v486 = vld [vmem:[%s265 + $0x28] sm:$0xf]
        %v487 = vld [vmem:[%s265 + $0x2c] sm:$0xf]
        %v488 = vld [vmem:[%s265 + $0x30] sm:$0xf]
        %v489 = vld [vmem:[%s265 + $0x34] sm:$0xf]
        %v490 = vld [vmem:[%s265 + $0x38] sm:$0xf]
        %v491 = vld [vmem:[%s265 + $0x3c] sm:$0xf]
        %v492 = vld [vmem:[#allocation2] sm:$0xf]
        %v509 = vunpack.c.l.b16 %v476
        %v510 = vunpack.c.l.b16 %v477
        %v511 = vunpack.c.l.b16 %v478
        %v512 = vunpack.c.l.b16 %v479
        %v513 = vunpack.c.l.b16 %v480
        %v514 = vunpack.c.l.b16 %v481
        %v515 = vunpack.c.l.b16 %v482
        %v516 = vunpack.c.l.b16 %v483
        %v517 = vunpack.c.l.b16 %v484
        %v518 = vunpack.c.l.b16 %v485
        %v519 = vunpack.c.l.b16 %v486
        %v520 = vunpack.c.l.b16 %v487
        %v521 = vunpack.c.l.b16 %v488
        %v522 = vunpack.c.l.b16 %v489
        %v523 = vunpack.c.l.b16 %v490
        %v524 = vunpack.c.l.b16 %v491
        %v525 = vpack.c.b16 %v510, %v509
        %v526 = vpack.c.b16 %v512, %v511
        %v527 = vpack.c.b16 %v514, %v513
        %v528 = vpack.c.b16 %v516, %v515
        %v529 = vpack.c.b16 %v518, %v517
        %v530 = vpack.c.b16 %v520, %v519
        %v531 = vpack.c.b16 %v522, %v521
        %v532 = vpack.c.b16 %v524, %v523
        %541 = vmatprep.subr.bf16.mxu0 0
        %542 = vmatpush1.bf16.xpose.msra.mxu0 %v525
        %543 = vmatprep.subr.bf16.mxu0 0
        %544 = vmatpush1.bf16.xpose.msra.mxu0 %v526
        %545 = vmatprep.subr.bf16.mxu0 0
        %546 = vmatpush1.bf16.xpose.msra.mxu0 %v527
        %547 = vmatprep.subr.bf16.mxu0 0
        %548 = vmatpush1.bf16.xpose.msra.mxu0 %v528
        %549 = vmatprep.subr.bf16.mxu0 0
        %550 = vmatpush1.bf16.xpose.msra.mxu0 %v529
        %551 = vmatprep.subr.bf16.mxu0 0
        %552 = vmatpush1.bf16.xpose.msra.mxu0 %v530
        %553 = vmatprep.subr.bf16.mxu0 0
        %554 = vmatpush1.bf16.xpose.msra.mxu0 %v531
        %555 = vmatprep.subr.bf16.mxu0 0
        %556 = vmatpush1.bf16.xpose.msra.mxu0 %v532
        %557 = vmatprep.subr.bf16.mxu0 0
        %558 = vmatpush1.bf16.xpose.msra.mxu0 0
        %559 = vmatprep.subr.bf16.mxu0 0
        %560 = vmatpush1.bf16.xpose.msra.mxu0 0
        %561 = vmatprep.subr.bf16.mxu0 0
        %562 = vmatpush1.bf16.xpose.msra.mxu0 0
        %563 = vmatprep.subr.bf16.mxu0 0
        %564 = vmatpush1.bf16.xpose.msra.mxu0 0
        %565 = vmatprep.subr.bf16.mxu0 0
        %566 = vmatpush1.bf16.xpose.msra.mxu0 0
        %567 = vmatprep.subr.bf16.mxu0 0
        %568 = vmatpush1.bf16.xpose.msra.mxu0 0
        %569 = vmatprep.subr.bf16.mxu0 0
        %570 = vmatpush1.bf16.xpose.msra.mxu0 0
        %571 = vmatprep.subr.bf16.mxu0 0
        %572 = vmatpush1.bf16.xpose.msra.mxu0 0
        %573 = vmatprep.mubr.bf16.mxu0 0
        %574 = vmatmul.mubr.bf16.gmra.mrb[0].mxu0 %v492
        %v575 = vpop.f32.mrb[0].mxu0
        %v576 = vadd.f32 0.0, %v575
        %v577 = vpop.f32.mrb[0].mxu0
        %v578 = vpop.f32.mrb[0].mxu0
        %v579 = vpop.f32.mrb[0].mxu0
        %580 = vdwg.mxu0
        %581 = vst [vmem:[%s294] sm:$0xff] %v576
        %v582 = vld [vmem:[#allocation2 + $0x4] sm:$0xf]
        %583 = vmatprep.subr.bf16.mxu0 0
        %584 = vmatpush1.bf16.xpose.msra.mxu0 %v525
        %585 = vmatprep.subr.bf16.mxu0 0
        %586 = vmatpush1.bf16.xpose.msra.mxu0 %v526
        %587 = vmatprep.subr.bf16.mxu0 0
        %588 = vmatpush1.bf16.xpose.msra.mxu0 %v527
        %589 = vmatprep.subr.bf16.mxu0 0
        %590 = vmatpush1.bf16.xpose.msra.mxu0 %v528
        %591 = vmatprep.subr.bf16.mxu0 0
        %592 = vmatpush1.bf16.xpose.msra.mxu0 %v529
        %593 = vmatprep.subr.bf16.mxu0 0
        %594 = vmatpush1.bf16.xpose.msra.mxu0 %v530
        %595 = vmatprep.subr.bf16.mxu0 0
        %596 = vmatpush1.bf16.xpose.msra.mxu0 %v531
        %597 = vmatprep.subr.bf16.mxu0 0
        %598 = vmatpush1.bf16.xpose.msra.mxu0 %v532
        %599 = vmatprep.subr.bf16.mxu0 0
        %600 = vmatpush1.bf16.xpose.msra.mxu0 0
        %601 = vmatprep.subr.bf16.mxu0 0
        %602 = vmatpush1.bf16.xpose.msra.mxu0 0
        %603 = vmatprep.subr.bf16.mxu0 0
        %604 = vmatpush1.bf16.xpose.msra.mxu0 0
        %605 = vmatprep.subr.bf16.mxu0 0
        %606 = vmatpush1.bf16.xpose.msra.mxu0 0
        %607 = vmatprep.subr.bf16.mxu0 0
        %608 = vmatpush1.bf16.xpose.msra.mxu0 0
        %609 = vmatprep.subr.bf16.mxu0 0
        %610 = vmatpush1.bf16.xpose.msra.mxu0 0
        %611 = vmatprep.subr.bf16.mxu0 0
        %612 = vmatpush1.bf16.xpose.msra.mxu0 0
        %613 = vmatprep.subr.bf16.mxu0 0
        %614 = vmatpush1.bf16.xpose.msra.mxu0 0
        %615 = vmatprep.mubr.bf16.mxu0 0
        %616 = vmatmul.mubr.bf16.gmra.mrb[0].mxu0 %v582
        %v617 = vpop.f32.mrb[0].mxu0
        %v618 = vadd.f32 0.0, %v617
        %v619 = vpop.f32.mrb[0].mxu0
        %v620 = vpop.f32.mrb[0].mxu0
        %v621 = vpop.f32.mrb[0].mxu0
        %622 = vdwg.mxu0
        %s623 = scalar_lea.vmem %s294, 8 [#allocation9]
        %624 = vst [vmem:[%s623] sm:$0xff] %v618
        %v625 = vld [vmem:[#allocation2 + $0x8] sm:$0xf]
        %626 = vmatprep.subr.bf16.mxu0 0
        %627 = vmatpush1.bf16.xpose.msra.mxu0 %v525
        %628 = vmatprep.subr.bf16.mxu0 0
        %629 = vmatpush1.bf16.xpose.msra.mxu0 %v526
        %630 = vmatprep.subr.bf16.mxu0 0
        %631 = vmatpush1.bf16.xpose.msra.mxu0 %v527
        %632 = vmatprep.subr.bf16.mxu0 0
        %633 = vmatpush1.bf16.xpose.msra.mxu0 %v528
        %634 = vmatprep.subr.bf16.mxu0 0
        %635 = vmatpush1.bf16.xpose.msra.mxu0 %v529
        %636 = vmatprep.subr.bf16.mxu0 0
        %637 = vmatpush1.bf16.xpose.msra.mxu0 %v530
        %638 = vmatprep.subr.bf16.mxu0 0
        %639 = vmatpush1.bf16.xpose.msra.mxu0 %v531
        %640 = vmatprep.subr.bf16.mxu0 0
        %641 = vmatpush1.bf16.xpose.msra.mxu0 %v532
        %642 = vmatprep.subr.bf16.mxu0 0
        %643 = vmatpush1.bf16.xpose.msra.mxu0 0
        %644 = vmatprep.subr.bf16.mxu0 0
        %645 = vmatpush1.bf16.xpose.msra.mxu0 0
        %646 = vmatprep.subr.bf16.mxu0 0
        %647 = vmatpush1.bf16.xpose.msra.mxu0 0
        %648 = vmatprep.subr.bf16.mxu0 0
        %649 = vmatpush1.bf16.xpose.msra.mxu0 0
        %650 = vmatprep.subr.bf16.mxu0 0
        %651 = vmatpush1.bf16.xpose.msra.mxu0 0
        %652 = vmatprep.subr.bf16.mxu0 0
        %653 = vmatpush1.bf16.xpose.msra.mxu0 0
        %654 = vmatprep.subr.bf16.mxu0 0
        %655 = vmatpush1.bf16.xpose.msra.mxu0 0
        %656 = vmatprep.subr.bf16.mxu0 0
        %657 = vmatpush1.bf16.xpose.msra.mxu0 0
        %658 = vmatprep.mubr.bf16.mxu0 0
        %659 = vmatmul.mubr.bf16.gmra.mrb[0].mxu0 %v625
        %v660 = vpop.f32.mrb[0].mxu0
        %v661 = vadd.f32 0.0, %v660
        %v662 = vpop.f32.mrb[0].mxu0
        %v663 = vpop.f32.mrb[0].mxu0
        %v664 = vpop.f32.mrb[0].mxu0
        %665 = vdwg.mxu0
        %s666 = scalar_lea.vmem %s294, 16 [#allocation9]
        %667 = vst [vmem:[%s666] sm:$0xff] %v661
        %v668 = vld [vmem:[#allocation2 + $0xc] sm:$0xf]
        %669 = vmatprep.subr.bf16.mxu0 0
        %670 = vmatpush1.bf16.xpose.msra.mxu0 %v525
        %671 = vmatprep.subr.bf16.mxu0 0
        %672 = vmatpush1.bf16.xpose.msra.mxu0 %v526
        %673 = vmatprep.subr.bf16.mxu0 0
        %674 = vmatpush1.bf16.xpose.msra.mxu0 %v527
        %675 = vmatprep.subr.bf16.mxu0 0
        %676 = vmatpush1.bf16.xpose.msra.mxu0 %v528
        %677 = vmatprep.subr.bf16.mxu0 0
        %678 = vmatpush1.bf16.xpose.msra.mxu0 %v529
        %679 = vmatprep.subr.bf16.mxu0 0
        %680 = vmatpush1.bf16.xpose.msra.mxu0 %v530
        %681 = vmatprep.subr.bf16.mxu0 0
        %682 = vmatpush1.bf16.xpose.msra.mxu0 %v531
        %683 = vmatprep.subr.bf16.mxu0 0
        %684 = vmatpush1.bf16.xpose.msra.mxu0 %v532
        %685 = vmatprep.subr.bf16.mxu0 0
        %686 = vmatpush1.bf16.xpose.msra.mxu0 0
        %687 = vmatprep.subr.bf16.mxu0 0
        %688 = vmatpush1.bf16.xpose.msra.mxu0 0
        %689 = vmatprep.subr.bf16.mxu0 0
        %690 = vmatpush1.bf16.xpose.msra.mxu0 0
        %691 = vmatprep.subr.bf16.mxu0 0
        %692 = vmatpush1.bf16.xpose.msra.mxu0 0
        %693 = vmatprep.subr.bf16.mxu0 0
        %694 = vmatpush1.bf16.xpose.msra.mxu0 0
        %695 = vmatprep.subr.bf16.mxu0 0
        %696 = vmatpush1.bf16.xpose.msra.mxu0 0
        %697 = vmatprep.subr.bf16.mxu0 0
        %698 = vmatpush1.bf16.xpose.msra.mxu0 0
        %699 = vmatprep.subr.bf16.mxu0 0
        %700 = vmatpush1.bf16.xpose.msra.mxu0 0
        %701 = vmatprep.mubr.bf16.mxu0 0
        %702 = vmatmul.mubr.bf16.gmra.mrb[0].mxu0 %v668
        %v703 = vpop.f32.mrb[0].mxu0
        %v704 = vadd.f32 0.0, %v703
        %v705 = vpop.f32.mrb[0].mxu0
        %v706 = vpop.f32.mrb[0].mxu0
        %v707 = vpop.f32.mrb[0].mxu0
        %708 = vdwg.mxu0
        %s709 = scalar_lea.vmem %s294, 24 [#allocation9]
        %710 = vst [vmem:[%s709] sm:$0xff] %v704
        %s711 = sand.u32 %s151, 1
        %s712 = scalar_lea.sflag [#allocation5], %s711
        %s713 = sand.u32 %s151, 1
        %s714 = smul.addr %s713, 32
        %s715 = scalar_lea.vmem [#allocation9], %s714
        // Predicated region
        $region53: #{tpu_custom_call.1} parent=35 // pred_check
          %p716 = pneg %p161
        $region54: #{tpu_custom_call.1} parent=35 // pred_check_branch
          %718 = sbr.rel (%p716) target = $region56
        $region55: #{tpu_custom_call.1} parent=35 // pred_region
          %s720 = ssub.s32 512, 512
          %721 = vsyncadd %s712, %s720
          %s722 = sadd.s32 %s29, %s28
          %s723 = smul.addr %s27, 4
          %s724 = sadd.s32 %s722, %s723
          %s725 = smul.addr %s724, 128
          %s726 = scalar_lea.hbm %s4, %s725
          %s727 = sshll.u32 %s715, 4
          %s728 = int_to_ptr.vmem [resolvable:$true] %s727
          %733 = dma.vmem_to_hbm [thread:$0]  %s728, 512, %s726, %s712, 128, 128, 8
        $region56: #{tpu_custom_call.1} parent=35 // pred_fallthru
          _
      $region36: #{tpu_custom_call.1} parent=5 // pred_fallthru
        _
      %p734 = scmp.le.s32.totalorder 2, %s17
      // Predicated region
      $region57: #{tpu_custom_call.1} parent=5 // pred_check
        %p735 = pneg %p734
      $region58: #{tpu_custom_call.1} parent=5 // pred_check_branch
        %737 = sbr.rel (%p735) target = $region60
      $region59: #{tpu_custom_call.1} parent=5 // pred_region
        %s738 = ssub.s32 %s17, 2
        // Predicated region
        $region61: #{tpu_custom_call.1} parent=59 // pred_check
          %p739 = pneg %p167
        $region62: #{tpu_custom_call.1} parent=59 // pred_check_branch
          %741 = sbr.rel (%p739) target = $region64
        $region63: #{tpu_custom_call.1} parent=59 // pred_region
          %s742 = sand.u32 %s152, 1
          %s743 = scalar_lea.sflag [#allocation5], %s742
          %s744 = sand.u32 %s152, 1
          %s745 = smul.addr %s744, 32
          %s746 = scalar_lea.vmem [#allocation9], %s745
          %747 = dma.done %s743, 512
        $region64: #{tpu_custom_call.1} parent=59 // pred_fallthru
          _
      $region60: #{tpu_custom_call.1} parent=5 // pred_fallthru
        _
    $region6: #{tpu_custom_call.1} parent=1 // loop_footer
      %s21 = sadd.s32 1, %s17
    $region7: #{tpu_custom_call.1} parent=1 // loop_footer_branch
      %16 = sbr.rel target = $region3
    $region8: #{tpu_custom_call.1} parent=1 // loop_exit
      _
    %748 = vsyncpa [#allocation4], 1
    %s749 = scalar_lea.sflag [#allocation4], 1
    %750 = vsyncpa %s749, 1
    %751 = vsyncpa [#allocation7], 1
    %752 = vsyncpa [#allocation5], 1
    %s753 = scalar_lea.sflag [#allocation5], 1
    %754 = vsyncpa %s753, 1

</llo_original>
